<compile_context>
chip_gen: v5e
topology: v5e:2x2
jax: 0.10.0
libtpu: 0.0.40
codegen_flags: <defaults>
</compile_context>

<pallas_src>
import jax
import jax.numpy as jnp
from jax import lax
from jax.experimental import pallas as pl
from jax.experimental.pallas import tpu as pltpu


# ----------------------------------------------------------------------------
# Fused Pallas kernel: single-layer LSTM recurrence + final linear
# ----------------------------------------------------------------------------
def lstm_fc_fused_kernel(x_ref, wih_ref, whh_ref, b_ref, fcw_ref, fcb_ref,
                         out_ref, xp_ref, h_ref, c_ref):
    """Whole forward pass in one kernel invocation (no grid).

    x_ref   : (T*Bp, I)   time-major flattened input (batch padded to Bp)
    wih_ref : (I, 4H)     W_ih^T   (PyTorch gate order i, f, g, o)
    whh_ref : (H, 4H)     W_hh^T
    b_ref   : (1, 4H)     b_ih + b_hh
    fcw_ref : (H, Fp)     fc.weight^T, zero-padded to lane width 128
    fcb_ref : (1, Fp)     fc.bias,     zero-padded to lane width 128
    out_ref : (Bp, Fp)    fc(h_T)   (lane-dense full-vreg store)
    xp_ref  : (T*Bp, 4H)  VMEM scratch: precomputed input projections
    h_ref   : (Bp, H)     VMEM scratch: hidden state
    c_ref   : (Bp, H)     VMEM scratch: cell state
    """
    Bp = out_ref.shape[0]
    H = whh_ref.shape[0]
    T = x_ref.shape[0] // Bp

    # Hoisted input projection for ALL timesteps: one MXU pass, off the
    # recurrence's critical path.  (T*Bp, I) @ (I, 4H) + bias -> (T*Bp, 4H).
    xp_ref[...] = (
        jnp.dot(x_ref[...], wih_ref[...], preferred_element_type=jnp.float32)
        + b_ref[...])

    whh = whh_ref[...]                              # (H, 4H), VMEM resident
    h_ref[...] = jnp.zeros_like(h_ref)
    c_ref[...] = jnp.zeros_like(c_ref)

    def step(t, carry):
        off = pl.multiple_of(t * Bp, 8)             # sublane-aligned slab
        gates = xp_ref[pl.ds(off, Bp), :] + jnp.dot(
            h_ref[...], whh, preferred_element_type=jnp.float32)   # (Bp, 4H)
        i_g = jax.nn.sigmoid(gates[:, 0 * H:1 * H])
        f_g = jax.nn.sigmoid(gates[:, 1 * H:2 * H])
        g_g = jnp.tanh(gates[:, 2 * H:3 * H])
        o_g = jax.nn.sigmoid(gates[:, 3 * H:4 * H])
        c_new = f_g * c_ref[...] + i_g * g_g
        c_ref[...] = c_new
        h_ref[...] = o_g * jnp.tanh(c_new)
        return carry

    # Static trip count; unroll so the LLO scheduler sees the whole chain.
    lax.fori_loop(0, T, step, 0, unroll=True)

    # Fused final linear: out = h_T @ fc_w^T + fc_b (one more MXU pass).
    out_ref[...] = (
        jnp.dot(h_ref[...], fcw_ref[...], preferred_element_type=jnp.float32)
        + fcb_ref[...])


# ----------------------------------------------------------------------------
# Wrapper (padding / layout plumbing in plain JAX, compute in Pallas)
# ----------------------------------------------------------------------------
def _round_up(n, m):
    return -(-n // m) * m


@jax.jit
def lstm_model_forward(params, x_btf):
    """Exact equivalent of LSTM_model.forward:

       _, (h_out, _) = lstm(x, (zeros, zeros))     # batch_first, zero init
       out = fc(h_out[0].view(-1, hidden_size))    # layer 0's final hidden
    """
    B, T, I = x_btf.shape
    lp0 = params["layers"][0]                       # only layer 0 affects out
    H = lp0["whh_t"].shape[0]
    F = params["fc_w_t"].shape[1]

    Bp = _round_up(B, 8)                            # sublane width
    Fp = _round_up(F, 128)                          # lane width

    # Pad batch with zero rows (sliced off at the end).
    x = jnp.pad(x_btf.astype(jnp.float32), ((0, Bp - B), (0, 0), (0, 0)))
    # Time-major flatten so every per-step slice inside the kernel is a
    # contiguous, tile-aligned block.
    x2d = jnp.transpose(x, (1, 0, 2)).reshape(T * Bp, I)

    # Pad FC weights/bias to a lane-dense output slab.
    fcw = jnp.pad(params["fc_w_t"], ((0, 0), (0, Fp - F)))
    fcb = jnp.pad(params["fc_b"], ((0, 0), (0, Fp - F)))

    out_p = pl.pallas_call(
        lstm_fc_fused_kernel,
        out_shape=jax.ShapeDtypeStruct((Bp, Fp), jnp.float32),
        # No grid: the whole (tiny) problem lives in VMEM for one invocation;
        # default BlockSpecs place each full array in VMEM.
        scratch_shapes=[
            pltpu.VMEM((T * Bp, 4 * H), jnp.float32),   # xp (input proj)
            pltpu.VMEM((Bp, H), jnp.float32),           # h
            pltpu.VMEM((Bp, H), jnp.float32),           # c
        ],
        compiler_params=pltpu.CompilerParams(vmem_limit_bytes=32 * 1024 * 1024),
    )(x2d, lp0["wih_t"], lp0["whh_t"], lp0["bias"], fcw, fcb)

    return out_p[:B, :F]


# ----------------------------------------------------------------------------
# Parameter init (mimics PyTorch U(-1/sqrt(H), 1/sqrt(H)))
# ----------------------------------------------------------------------------
def init_params(key, input_size, hidden_size, num_layers, out_features):
    params = {"layers": []}
    k = 1.0 / jnp.sqrt(jnp.float32(hidden_size))
    for layer in range(num_layers):
        in_sz = input_size if layer == 0 else hidden_size
        key, k1, k2, k3, k4 = jax.random.split(key, 5)
        w_ih = jax.random.uniform(k1, (4 * hidden_size, in_sz), jnp.float32, -k, k)
        w_hh = jax.random.uniform(k2, (4 * hidden_size, hidden_size), jnp.float32, -k, k)
        b_ih = jax.random.uniform(k3, (4 * hidden_size,), jnp.float32, -k, k)
        b_hh = jax.random.uniform(k4, (4 * hidden_size,), jnp.float32, -k, k)
        params["layers"].append({
            "wih_t": w_ih.T,                        # (in_sz, 4H)
            "whh_t": w_hh.T,                        # (H, 4H)
            "bias": (b_ih + b_hh)[None, :],         # (1, 4H)
        })
    key, k5, k6 = jax.random.split(key, 3)
    w_fc = jax.random.uniform(k5, (out_features, hidden_size), jnp.float32, -k, k)
    b_fc = jax.random.uniform(k6, (out_features,), jnp.float32, -k, k)
    params["fc_w_t"] = w_fc.T                       # (H, F)
    params["fc_b"] = b_fc[None, :]                  # (1, F)
    return params


# ----------------------------------------------------------------------------
# Pure-JAX reference (built-in correctness check vs the PyTorch semantics)
# ----------------------------------------------------------------------------
def reference_forward(params, x_btf):
    lp0 = params["layers"][0]
    H = lp0["whh_t"].shape[0]
    B, T, _ = x_btf.shape
    h = jnp.zeros((B, H), jnp.float32)
    c = jnp.zeros((B, H), jnp.float32)
    for t in range(T):
        g = x_btf[:, t, :] @ lp0["wih_t"] + h @ lp0["whh_t"] + lp0["bias"]
        i_g = jax.nn.sigmoid(g[:, :H])
        f_g = jax.nn.sigmoid(g[:, H:2 * H])
        g_g = jnp.tanh(g[:, 2 * H:3 * H])
        o_g = jax.nn.sigmoid(g[:, 3 * H:])
        c = f_g * c + i_g * g_g
        h = o_g * jnp.tanh(c)
    return h @ params["fc_w_t"] + params["fc_b"]


# ----------------------------------------------------------------------------
# Main
# ----------------------------------------------------------------------------
if __name__ == "__main__":
    batch = 2
    seq = 8
    input_size = 16
    hidden_size = 32
    num_layers = 2
    out_features = 4

    key = jax.random.PRNGKey(0)
    key_x, key_p = jax.random.split(key)
    x = jax.random.normal(key_x, (batch, seq, input_size), dtype=jnp.float32)
    params = init_params(key_p, input_size, hidden_size, num_layers, out_features)

    out = lstm_model_forward(params, x)
    out = jax.block_until_ready(out)
    assert out.shape == (batch, out_features), out.shape

    ref = reference_forward(params, x)
    assert bool(jnp.allclose(out, ref, atol=1e-5, rtol=1e-5)), (
        "mismatch vs pure-JAX reference")

    print("KERNEL_OK")
</pallas_src>

<mosaic_0001>
module attributes {stable_mosaic.version = 11 : i64} {
  func.func @lstm_fc_fused_kernel(%arg0: memref<64x16xf32, #tpu.memory_space<vmem>>, %arg1: memref<16x128xf32, #tpu.memory_space<vmem>>, %arg2: memref<32x128xf32, #tpu.memory_space<vmem>>, %arg3: memref<1x128xf32, #tpu.memory_space<vmem>>, %arg4: memref<32x128xf32, #tpu.memory_space<vmem>>, %arg5: memref<1x128xf32, #tpu.memory_space<vmem>>, %arg6: memref<8x128xf32, #tpu.memory_space<vmem>>, %arg7: memref<64x128xf32, #tpu.memory_space<vmem>>, %arg8: memref<8x32xf32, #tpu.memory_space<vmem>>, %arg9: memref<8x32xf32, #tpu.memory_space<vmem>>) attributes {dimension_semantics = [], scalar_prefetch = 0 : i64, scratch_operands = 3 : i64, tpu.core_type = #tpu.core_type<tc>} {
    %c0 = arith.constant 0 : index
    %c0_0 = arith.constant 0 : index
    %0 = vector.load %arg0[%c0, %c0_0] : memref<64x16xf32, #tpu.memory_space<vmem>>, vector<64x16xf32>
    %c0_1 = arith.constant 0 : index
    %c0_2 = arith.constant 0 : index
    %1 = vector.load %arg1[%c0_1, %c0_2] : memref<16x128xf32, #tpu.memory_space<vmem>>, vector<16x128xf32>
    %cst = arith.constant dense<0.000000e+00> : vector<64x128xf32>
    %2 = tpu.matmul %0, %1, %cst {dimension_numbers = #tpu.dot_dimension_numbers<[1], [0], [0], [1], [0, 0, 1, 1], [], []>} : vector<64x16xf32>, vector<16x128xf32>, vector<64x128xf32> -> vector<64x128xf32>
    %c0_3 = arith.constant 0 : index
    %c0_4 = arith.constant 0 : index
    %3 = vector.load %arg3[%c0_3, %c0_4] : memref<1x128xf32, #tpu.memory_space<vmem>>, vector<1x128xf32>
    %4 = vector.broadcast %3 : vector<1x128xf32> to vector<64x128xf32>
    %5 = arith.addf %2, %4 : vector<64x128xf32>
    %c0_5 = arith.constant 0 : index
    %c0_6 = arith.constant 0 : index
    %6 = vector.load %arg7[%c0_5, %c0_6] : memref<64x128xf32, #tpu.memory_space<vmem>>, vector<64x128xf32>
    tpu.vector_store %arg7[%c0_5, %c0_6], %5 {strides = array<i32>} : memref<64x128xf32, #tpu.memory_space<vmem>>, vector<64x128xf32>,
    %c0_7 = arith.constant 0 : index
    %c0_8 = arith.constant 0 : index
    %7 = vector.load %arg2[%c0_7, %c0_8] : memref<32x128xf32, #tpu.memory_space<vmem>>, vector<32x128xf32>
    %cst_9 = arith.constant 0.000000e+00 : f32
    %8 = vector.broadcast %cst_9 : f32 to vector<8x32xf32>
    %c0_10 = arith.constant 0 : index
    %c0_11 = arith.constant 0 : index
    %9 = vector.load %arg8[%c0_10, %c0_11] : memref<8x32xf32, #tpu.memory_space<vmem>>, vector<8x32xf32>
    tpu.vector_store %arg8[%c0_10, %c0_11], %8 {strides = array<i32>} : memref<8x32xf32, #tpu.memory_space<vmem>>, vector<8x32xf32>,
    %cst_12 = arith.constant 0.000000e+00 : f32
    %10 = vector.broadcast %cst_12 : f32 to vector<8x32xf32>
    %c0_13 = arith.constant 0 : index
    %c0_14 = arith.constant 0 : index
    %11 = vector.load %arg9[%c0_13, %c0_14] : memref<8x32xf32, #tpu.memory_space<vmem>>, vector<8x32xf32>
    tpu.vector_store %arg9[%c0_13, %c0_14], %10 {strides = array<i32>} : memref<8x32xf32, #tpu.memory_space<vmem>>, vector<8x32xf32>,
    %c0_i32 = arith.constant 0 : i32
    %c8_i32 = arith.constant 8 : i32
    %12 = arith.muli %c0_i32, %c8_i32 : i32
    %13 = tpu.assume_multiple %12, 8 : i32
    %14 = arith.index_cast %13 : i32 to index
    %c0_15 = arith.constant 0 : index
    %15 = vector.load %arg7[%14, %c0_15] : memref<64x128xf32, #tpu.memory_space<vmem>>, vector<8x128xf32>
    %c0_16 = arith.constant 0 : index
    %c0_17 = arith.constant 0 : index
    %16 = vector.load %arg8[%c0_16, %c0_17] : memref<8x32xf32, #tpu.memory_space<vmem>>, vector<8x32xf32>
    %cst_18 = arith.constant dense<0.000000e+00> : vector<8x128xf32>
    %17 = tpu.matmul %16, %7, %cst_18 {dimension_numbers = #tpu.dot_dimension_numbers<[1], [0], [0], [1], [0, 0, 1, 1], [], []>} : vector<8x32xf32>, vector<32x128xf32>, vector<8x128xf32> -> vector<8x128xf32>
    %18 = arith.addf %15, %17 : vector<8x128xf32>
    %19 = vector.extract_strided_slice %18 {offsets = [0, 0], sizes = [8, 32], strides = [1, 1]} : vector<8x128xf32> to vector<8x32xf32>
    %20 = arith.negf %19 : vector<8x32xf32>
    %21 = math.exp %20 : vector<8x32xf32>
    %cst_19 = arith.constant 1.000000e+00 : f32
    %22 = vector.broadcast %cst_19 : f32 to vector<8x32xf32>
    %23 = arith.addf %22, %21 : vector<8x32xf32>
    %24 = arith.divf %22, %23 : vector<8x32xf32>
    %25 = vector.extract_strided_slice %18 {offsets = [0, 32], sizes = [8, 32], strides = [1, 1]} : vector<8x128xf32> to vector<8x32xf32>
    %26 = arith.negf %25 : vector<8x32xf32>
    %27 = math.exp %26 : vector<8x32xf32>
    %cst_20 = arith.constant 1.000000e+00 : f32
    %28 = vector.broadcast %cst_20 : f32 to vector<8x32xf32>
    %29 = arith.addf %28, %27 : vector<8x32xf32>
    %30 = arith.divf %28, %29 : vector<8x32xf32>
    %31 = vector.extract_strided_slice %18 {offsets = [0, 64], sizes = [8, 32], strides = [1, 1]} : vector<8x128xf32> to vector<8x32xf32>
    %32 = math.tanh %31 : vector<8x32xf32>
    %33 = vector.extract_strided_slice %18 {offsets = [0, 96], sizes = [8, 32], strides = [1, 1]} : vector<8x128xf32> to vector<8x32xf32>
    %34 = arith.negf %33 : vector<8x32xf32>
    %35 = math.exp %34 : vector<8x32xf32>
    %cst_21 = arith.constant 1.000000e+00 : f32
    %36 = vector.broadcast %cst_21 : f32 to vector<8x32xf32>
    %37 = arith.addf %36, %35 : vector<8x32xf32>
    %38 = arith.divf %36, %37 : vector<8x32xf32>
    %c0_22 = arith.constant 0 : index
    %c0_23 = arith.constant 0 : index
    %39 = vector.load %arg9[%c0_22, %c0_23] : memref<8x32xf32, #tpu.memory_space<vmem>>, vector<8x32xf32>
    %40 = arith.mulf %30, %39 : vector<8x32xf32>
    %41 = arith.mulf %24, %32 : vector<8x32xf32>
    %42 = arith.addf %40, %41 : vector<8x32xf32>
    %c0_24 = arith.constant 0 : index
    %c0_25 = arith.constant 0 : index
    %43 = vector.load %arg9[%c0_24, %c0_25] : memref<8x32xf32, #tpu.memory_space<vmem>>, vector<8x32xf32>
    tpu.vector_store %arg9[%c0_24, %c0_25], %42 {strides = array<i32>} : memref<8x32xf32, #tpu.memory_space<vmem>>, vector<8x32xf32>,
    %44 = math.tanh %42 : vector<8x32xf32>
    %45 = arith.mulf %38, %44 : vector<8x32xf32>
    %c0_26 = arith.constant 0 : index
    %c0_27 = arith.constant 0 : index
    %46 = vector.load %arg8[%c0_26, %c0_27] : memref<8x32xf32, #tpu.memory_space<vmem>>, vector<8x32xf32>
    tpu.vector_store %arg8[%c0_26, %c0_27], %45 {strides = array<i32>} : memref<8x32xf32, #tpu.memory_space<vmem>>, vector<8x32xf32>,
    %c1_i32 = arith.constant 1 : i32
    %c8_i32_28 = arith.constant 8 : i32
    %47 = arith.muli %c1_i32, %c8_i32_28 : i32
    %48 = tpu.assume_multiple %47, 8 : i32
    %49 = arith.index_cast %48 : i32 to index
    %c0_29 = arith.constant 0 : index
    %50 = vector.load %arg7[%49, %c0_29] : memref<64x128xf32, #tpu.memory_space<vmem>>, vector<8x128xf32>
    %c0_30 = arith.constant 0 : index
    %c0_31 = arith.constant 0 : index
    %51 = vector.load %arg8[%c0_30, %c0_31] : memref<8x32xf32, #tpu.memory_space<vmem>>, vector<8x32xf32>
    %cst_32 = arith.constant dense<0.000000e+00> : vector<8x128xf32>
    %52 = tpu.matmul %51, %7, %cst_32 {dimension_numbers = #tpu.dot_dimension_numbers<[1], [0], [0], [1], [0, 0, 1, 1], [], []>} : vector<8x32xf32>, vector<32x128xf32>, vector<8x128xf32> -> vector<8x128xf32>
    %53 = arith.addf %50, %52 : vector<8x128xf32>
    %54 = vector.extract_strided_slice %53 {offsets = [0, 0], sizes = [8, 32], strides = [1, 1]} : vector<8x128xf32> to vector<8x32xf32>
    %55 = arith.negf %54 : vector<8x32xf32>
    %56 = math.exp %55 : vector<8x32xf32>
    %cst_33 = arith.constant 1.000000e+00 : f32
    %57 = vector.broadcast %cst_33 : f32 to vector<8x32xf32>
    %58 = arith.addf %57, %56 : vector<8x32xf32>
    %59 = arith.divf %57, %58 : vector<8x32xf32>
    %60 = vector.extract_strided_slice %53 {offsets = [0, 32], sizes = [8, 32], strides = [1, 1]} : vector<8x128xf32> to vector<8x32xf32>
    %61 = arith.negf %60 : vector<8x32xf32>
    %62 = math.exp %61 : vector<8x32xf32>
    %cst_34 = arith.constant 1.000000e+00 : f32
    %63 = vector.broadcast %cst_34 : f32 to vector<8x32xf32>
    %64 = arith.addf %63, %62 : vector<8x32xf32>
    %65 = arith.divf %63, %64 : vector<8x32xf32>
    %66 = vector.extract_strided_slice %53 {offsets = [0, 64], sizes = [8, 32], strides = [1, 1]} : vector<8x128xf32> to vector<8x32xf32>
    %67 = math.tanh %66 : vector<8x32xf32>
    %68 = vector.extract_strided_slice %53 {offsets = [0, 96], sizes = [8, 32], strides = [1, 1]} : vector<8x128xf32> to vector<8x32xf32>
    %69 = arith.negf %68 : vector<8x32xf32>
    %70 = math.exp %69 : vector<8x32xf32>
    %cst_35 = arith.constant 1.000000e+00 : f32
    %71 = vector.broadcast %cst_35 : f32 to vector<8x32xf32>
    %72 = arith.addf %71, %70 : vector<8x32xf32>
    %73 = arith.divf %71, %72 : vector<8x32xf32>
    %c0_36 = arith.constant 0 : index
    %c0_37 = arith.constant 0 : index
    %74 = vector.load %arg9[%c0_36, %c0_37] : memref<8x32xf32, #tpu.memory_space<vmem>>, vector<8x32xf32>
    %75 = arith.mulf %65, %74 : vector<8x32xf32>
    %76 = arith.mulf %59, %67 : vector<8x32xf32>
    %77 = arith.addf %75, %76 : vector<8x32xf32>
    %c0_38 = arith.constant 0 : index
    %c0_39 = arith.constant 0 : index
    %78 = vector.load %arg9[%c0_38, %c0_39] : memref<8x32xf32, #tpu.memory_space<vmem>>, vector<8x32xf32>
    tpu.vector_store %arg9[%c0_38, %c0_39], %77 {strides = array<i32>} : memref<8x32xf32, #tpu.memory_space<vmem>>, vector<8x32xf32>,
    %79 = math.tanh %77 : vector<8x32xf32>
    %80 = arith.mulf %73, %79 : vector<8x32xf32>
    %c0_40 = arith.constant 0 : index
    %c0_41 = arith.constant 0 : index
    %81 = vector.load %arg8[%c0_40, %c0_41] : memref<8x32xf32, #tpu.memory_space<vmem>>, vector<8x32xf32>
    tpu.vector_store %arg8[%c0_40, %c0_41], %80 {strides = array<i32>} : memref<8x32xf32, #tpu.memory_space<vmem>>, vector<8x32xf32>,
    %c2_i32 = arith.constant 2 : i32
    %c8_i32_42 = arith.constant 8 : i32
    %82 = arith.muli %c2_i32, %c8_i32_42 : i32
    %83 = tpu.assume_multiple %82, 8 : i32
    %84 = arith.index_cast %83 : i32 to index
    %c0_43 = arith.constant 0 : index
    %85 = vector.load %arg7[%84, %c0_43] : memref<64x128xf32, #tpu.memory_space<vmem>>, vector<8x128xf32>
    %c0_44 = arith.constant 0 : index
    %c0_45 = arith.constant 0 : index
    %86 = vector.load %arg8[%c0_44, %c0_45] : memref<8x32xf32, #tpu.memory_space<vmem>>, vector<8x32xf32>
    %cst_46 = arith.constant dense<0.000000e+00> : vector<8x128xf32>
    %87 = tpu.matmul %86, %7, %cst_46 {dimension_numbers = #tpu.dot_dimension_numbers<[1], [0], [0], [1], [0, 0, 1, 1], [], []>} : vector<8x32xf32>, vector<32x128xf32>, vector<8x128xf32> -> vector<8x128xf32>
    %88 = arith.addf %85, %87 : vector<8x128xf32>
    %89 = vector.extract_strided_slice %88 {offsets = [0, 0], sizes = [8, 32], strides = [1, 1]} : vector<8x128xf32> to vector<8x32xf32>
    %90 = arith.negf %89 : vector<8x32xf32>
    %91 = math.exp %90 : vector<8x32xf32>
    %cst_47 = arith.constant 1.000000e+00 : f32
    %92 = vector.broadcast %cst_47 : f32 to vector<8x32xf32>
    %93 = arith.addf %92, %91 : vector<8x32xf32>
    %94 = arith.divf %92, %93 : vector<8x32xf32>
    %95 = vector.extract_strided_slice %88 {offsets = [0, 32], sizes = [8, 32], strides = [1, 1]} : vector<8x128xf32> to vector<8x32xf32>
    %96 = arith.negf %95 : vector<8x32xf32>
    %97 = math.exp %96 : vector<8x32xf32>
    %cst_48 = arith.constant 1.000000e+00 : f32
    %98 = vector.broadcast %cst_48 : f32 to vector<8x32xf32>
    %99 = arith.addf %98, %97 : vector<8x32xf32>
    %100 = arith.divf %98, %99 : vector<8x32xf32>
    %101 = vector.extract_strided_slice %88 {offsets = [0, 64], sizes = [8, 32], strides = [1, 1]} : vector<8x128xf32> to vector<8x32xf32>
    %102 = math.tanh %101 : vector<8x32xf32>
    %103 = vector.extract_strided_slice %88 {offsets = [0, 96], sizes = [8, 32], strides = [1, 1]} : vector<8x128xf32> to vector<8x32xf32>
    %104 = arith.negf %103 : vector<8x32xf32>
    %105 = math.exp %104 : vector<8x32xf32>
    %cst_49 = arith.constant 1.000000e+00 : f32
    %106 = vector.broadcast %cst_49 : f32 to vector<8x32xf32>
    %107 = arith.addf %106, %105 : vector<8x32xf32>
    %108 = arith.divf %106, %107 : vector<8x32xf32>
    %c0_50 = arith.constant 0 : index
    %c0_51 = arith.constant 0 : index
    %109 = vector.load %arg9[%c0_50, %c0_51] : memref<8x32xf32, #tpu.memory_space<vmem>>, vector<8x32xf32>
    %110 = arith.mulf %100, %109 : vector<8x32xf32>
    %111 = arith.mulf %94, %102 : vector<8x32xf32>
    %112 = arith.addf %110, %111 : vector<8x32xf32>
    %c0_52 = arith.constant 0 : index
    %c0_53 = arith.constant 0 : index
    %113 = vector.load %arg9[%c0_52, %c0_53] : memref<8x32xf32, #tpu.memory_space<vmem>>, vector<8x32xf32>
    tpu.vector_store %arg9[%c0_52, %c0_53], %112 {strides = array<i32>} : memref<8x32xf32, #tpu.memory_space<vmem>>, vector<8x32xf32>,
    %114 = math.tanh %112 : vector<8x32xf32>
    %115 = arith.mulf %108, %114 : vector<8x32xf32>
    %c0_54 = arith.constant 0 : index
    %c0_55 = arith.constant 0 : index
    %116 = vector.load %arg8[%c0_54, %c0_55] : memref<8x32xf32, #tpu.memory_space<vmem>>, vector<8x32xf32>
    tpu.vector_store %arg8[%c0_54, %c0_55], %115 {strides = array<i32>} : memref<8x32xf32, #tpu.memory_space<vmem>>, vector<8x32xf32>,
    %c3_i32 = arith.constant 3 : i32
    %c8_i32_56 = arith.constant 8 : i32
    %117 = arith.muli %c3_i32, %c8_i32_56 : i32
    %118 = tpu.assume_multiple %117, 8 : i32
    %119 = arith.index_cast %118 : i32 to index
    %c0_57 = arith.constant 0 : index
    %120 = vector.load %arg7[%119, %c0_57] : memref<64x128xf32, #tpu.memory_space<vmem>>, vector<8x128xf32>
    %c0_58 = arith.constant 0 : index
    %c0_59 = arith.constant 0 : index
    %121 = vector.load %arg8[%c0_58, %c0_59] : memref<8x32xf32, #tpu.memory_space<vmem>>, vector<8x32xf32>
    %cst_60 = arith.constant dense<0.000000e+00> : vector<8x128xf32>
    %122 = tpu.matmul %121, %7, %cst_60 {dimension_numbers = #tpu.dot_dimension_numbers<[1], [0], [0], [1], [0, 0, 1, 1], [], []>} : vector<8x32xf32>, vector<32x128xf32>, vector<8x128xf32> -> vector<8x128xf32>
    %123 = arith.addf %120, %122 : vector<8x128xf32>
    %124 = vector.extract_strided_slice %123 {offsets = [0, 0], sizes = [8, 32], strides = [1, 1]} : vector<8x128xf32> to vector<8x32xf32>
    %125 = arith.negf %124 : vector<8x32xf32>
    %126 = math.exp %125 : vector<8x32xf32>
    %cst_61 = arith.constant 1.000000e+00 : f32
    %127 = vector.broadcast %cst_61 : f32 to vector<8x32xf32>
    %128 = arith.addf %127, %126 : vector<8x32xf32>
    %129 = arith.divf %127, %128 : vector<8x32xf32>
    %130 = vector.extract_strided_slice %123 {offsets = [0, 32], sizes = [8, 32], strides = [1, 1]} : vector<8x128xf32> to vector<8x32xf32>
    %131 = arith.negf %130 : vector<8x32xf32>
    %132 = math.exp %131 : vector<8x32xf32>
    %cst_62 = arith.constant 1.000000e+00 : f32
    %133 = vector.broadcast %cst_62 : f32 to vector<8x32xf32>
    %134 = arith.addf %133, %132 : vector<8x32xf32>
    %135 = arith.divf %133, %134 : vector<8x32xf32>
    %136 = vector.extract_strided_slice %123 {offsets = [0, 64], sizes = [8, 32], strides = [1, 1]} : vector<8x128xf32> to vector<8x32xf32>
    %137 = math.tanh %136 : vector<8x32xf32>
    %138 = vector.extract_strided_slice %123 {offsets = [0, 96], sizes = [8, 32], strides = [1, 1]} : vector<8x128xf32> to vector<8x32xf32>
    %139 = arith.negf %138 : vector<8x32xf32>
    %140 = math.exp %139 : vector<8x32xf32>
    %cst_63 = arith.constant 1.000000e+00 : f32
    %141 = vector.broadcast %cst_63 : f32 to vector<8x32xf32>
    %142 = arith.addf %141, %140 : vector<8x32xf32>
    %143 = arith.divf %141, %142 : vector<8x32xf32>
    %c0_64 = arith.constant 0 : index
    %c0_65 = arith.constant 0 : index
    %144 = vector.load %arg9[%c0_64, %c0_65] : memref<8x32xf32, #tpu.memory_space<vmem>>, vector<8x32xf32>
    %145 = arith.mulf %135, %144 : vector<8x32xf32>
    %146 = arith.mulf %129, %137 : vector<8x32xf32>
    %147 = arith.addf %145, %146 : vector<8x32xf32>
    %c0_66 = arith.constant 0 : index
    %c0_67 = arith.constant 0 : index
    %148 = vector.load %arg9[%c0_66, %c0_67] : memref<8x32xf32, #tpu.memory_space<vmem>>, vector<8x32xf32>
    tpu.vector_store %arg9[%c0_66, %c0_67], %147 {strides = array<i32>} : memref<8x32xf32, #tpu.memory_space<vmem>>, vector<8x32xf32>,
    %149 = math.tanh %147 : vector<8x32xf32>
    %150 = arith.mulf %143, %149 : vector<8x32xf32>
    %c0_68 = arith.constant 0 : index
    %c0_69 = arith.constant 0 : index
    %151 = vector.load %arg8[%c0_68, %c0_69] : memref<8x32xf32, #tpu.memory_space<vmem>>, vector<8x32xf32>
    tpu.vector_store %arg8[%c0_68, %c0_69], %150 {strides = array<i32>} : memref<8x32xf32, #tpu.memory_space<vmem>>, vector<8x32xf32>,
    %c4_i32 = arith.constant 4 : i32
    %c8_i32_70 = arith.constant 8 : i32
    %152 = arith.muli %c4_i32, %c8_i32_70 : i32
    %153 = tpu.assume_multiple %152, 8 : i32
    %154 = arith.index_cast %153 : i32 to index
    %c0_71 = arith.constant 0 : index
    %155 = vector.load %arg7[%154, %c0_71] : memref<64x128xf32, #tpu.memory_space<vmem>>, vector<8x128xf32>
    %c0_72 = arith.constant 0 : index
    %c0_73 = arith.constant 0 : index
    %156 = vector.load %arg8[%c0_72, %c0_73] : memref<8x32xf32, #tpu.memory_space<vmem>>, vector<8x32xf32>
    %cst_74 = arith.constant dense<0.000000e+00> : vector<8x128xf32>
    %157 = tpu.matmul %156, %7, %cst_74 {dimension_numbers = #tpu.dot_dimension_numbers<[1], [0], [0], [1], [0, 0, 1, 1], [], []>} : vector<8x32xf32>, vector<32x128xf32>, vector<8x128xf32> -> vector<8x128xf32>
    %158 = arith.addf %155, %157 : vector<8x128xf32>
    %159 = vector.extract_strided_slice %158 {offsets = [0, 0], sizes = [8, 32], strides = [1, 1]} : vector<8x128xf32> to vector<8x32xf32>
    %160 = arith.negf %159 : vector<8x32xf32>
    %161 = math.exp %160 : vector<8x32xf32>
    %cst_75 = arith.constant 1.000000e+00 : f32
    %162 = vector.broadcast %cst_75 : f32 to vector<8x32xf32>
    %163 = arith.addf %162, %161 : vector<8x32xf32>
    %164 = arith.divf %162, %163 : vector<8x32xf32>
    %165 = vector.extract_strided_slice %158 {offsets = [0, 32], sizes = [8, 32], strides = [1, 1]} : vector<8x128xf32> to vector<8x32xf32>
    %166 = arith.negf %165 : vector<8x32xf32>
    %167 = math.exp %166 : vector<8x32xf32>
    %cst_76 = arith.constant 1.000000e+00 : f32
    %168 = vector.broadcast %cst_76 : f32 to vector<8x32xf32>
    %169 = arith.addf %168, %167 : vector<8x32xf32>
    %170 = arith.divf %168, %169 : vector<8x32xf32>
    %171 = vector.extract_strided_slice %158 {offsets = [0, 64], sizes = [8, 32], strides = [1, 1]} : vector<8x128xf32> to vector<8x32xf32>
    %172 = math.tanh %171 : vector<8x32xf32>
    %173 = vector.extract_strided_slice %158 {offsets = [0, 96], sizes = [8, 32], strides = [1, 1]} : vector<8x128xf32> to vector<8x32xf32>
    %174 = arith.negf %173 : vector<8x32xf32>
    %175 = math.exp %174 : vector<8x32xf32>
    %cst_77 = arith.constant 1.000000e+00 : f32
    %176 = vector.broadcast %cst_77 : f32 to vector<8x32xf32>
    %177 = arith.addf %176, %175 : vector<8x32xf32>
    %178 = arith.divf %176, %177 : vector<8x32xf32>
    %c0_78 = arith.constant 0 : index
    %c0_79 = arith.constant 0 : index
    %179 = vector.load %arg9[%c0_78, %c0_79] : memref<8x32xf32, #tpu.memory_space<vmem>>, vector<8x32xf32>
    %180 = arith.mulf %170, %179 : vector<8x32xf32>
    %181 = arith.mulf %164, %172 : vector<8x32xf32>
    %182 = arith.addf %180, %181 : vector<8x32xf32>
    %c0_80 = arith.constant 0 : index
    %c0_81 = arith.constant 0 : index
    %183 = vector.load %arg9[%c0_80, %c0_81] : memref<8x32xf32, #tpu.memory_space<vmem>>, vector<8x32xf32>
    tpu.vector_store %arg9[%c0_80, %c0_81], %182 {strides = array<i32>} : memref<8x32xf32, #tpu.memory_space<vmem>>, vector<8x32xf32>,
    %184 = math.tanh %182 : vector<8x32xf32>
    %185 = arith.mulf %178, %184 : vector<8x32xf32>
    %c0_82 = arith.constant 0 : index
    %c0_83 = arith.constant 0 : index
    %186 = vector.load %arg8[%c0_82, %c0_83] : memref<8x32xf32, #tpu.memory_space<vmem>>, vector<8x32xf32>
    tpu.vector_store %arg8[%c0_82, %c0_83], %185 {strides = array<i32>} : memref<8x32xf32, #tpu.memory_space<vmem>>, vector<8x32xf32>,
    %c5_i32 = arith.constant 5 : i32
    %c8_i32_84 = arith.constant 8 : i32
    %187 = arith.muli %c5_i32, %c8_i32_84 : i32
    %188 = tpu.assume_multiple %187, 8 : i32
    %189 = arith.index_cast %188 : i32 to index
    %c0_85 = arith.constant 0 : index
    %190 = vector.load %arg7[%189, %c0_85] : memref<64x128xf32, #tpu.memory_space<vmem>>, vector<8x128xf32>
    %c0_86 = arith.constant 0 : index
    %c0_87 = arith.constant 0 : index
    %191 = vector.load %arg8[%c0_86, %c0_87] : memref<8x32xf32, #tpu.memory_space<vmem>>, vector<8x32xf32>
    %cst_88 = arith.constant dense<0.000000e+00> : vector<8x128xf32>
    %192 = tpu.matmul %191, %7, %cst_88 {dimension_numbers = #tpu.dot_dimension_numbers<[1], [0], [0], [1], [0, 0, 1, 1], [], []>} : vector<8x32xf32>, vector<32x128xf32>, vector<8x128xf32> -> vector<8x128xf32>
    %193 = arith.addf %190, %192 : vector<8x128xf32>
    %194 = vector.extract_strided_slice %193 {offsets = [0, 0], sizes = [8, 32], strides = [1, 1]} : vector<8x128xf32> to vector<8x32xf32>
    %195 = arith.negf %194 : vector<8x32xf32>
    %196 = math.exp %195 : vector<8x32xf32>
    %cst_89 = arith.constant 1.000000e+00 : f32
    %197 = vector.broadcast %cst_89 : f32 to vector<8x32xf32>
    %198 = arith.addf %197, %196 : vector<8x32xf32>
    %199 = arith.divf %197, %198 : vector<8x32xf32>
    %200 = vector.extract_strided_slice %193 {offsets = [0, 32], sizes = [8, 32], strides = [1, 1]} : vector<8x128xf32> to vector<8x32xf32>
    %201 = arith.negf %200 : vector<8x32xf32>
    %202 = math.exp %201 : vector<8x32xf32>
    %cst_90 = arith.constant 1.000000e+00 : f32
    %203 = vector.broadcast %cst_90 : f32 to vector<8x32xf32>
    %204 = arith.addf %203, %202 : vector<8x32xf32>
    %205 = arith.divf %203, %204 : vector<8x32xf32>
    %206 = vector.extract_strided_slice %193 {offsets = [0, 64], sizes = [8, 32], strides = [1, 1]} : vector<8x128xf32> to vector<8x32xf32>
    %207 = math.tanh %206 : vector<8x32xf32>
    %208 = vector.extract_strided_slice %193 {offsets = [0, 96], sizes = [8, 32], strides = [1, 1]} : vector<8x128xf32> to vector<8x32xf32>
    %209 = arith.negf %208 : vector<8x32xf32>
    %210 = math.exp %209 : vector<8x32xf32>
    %cst_91 = arith.constant 1.000000e+00 : f32
    %211 = vector.broadcast %cst_91 : f32 to vector<8x32xf32>
    %212 = arith.addf %211, %210 : vector<8x32xf32>
    %213 = arith.divf %211, %212 : vector<8x32xf32>
    %c0_92 = arith.constant 0 : index
    %c0_93 = arith.constant 0 : index
    %214 = vector.load %arg9[%c0_92, %c0_93] : memref<8x32xf32, #tpu.memory_space<vmem>>, vector<8x32xf32>
    %215 = arith.mulf %205, %214 : vector<8x32xf32>
    %216 = arith.mulf %199, %207 : vector<8x32xf32>
    %217 = arith.addf %215, %216 : vector<8x32xf32>
    %c0_94 = arith.constant 0 : index
    %c0_95 = arith.constant 0 : index
    %218 = vector.load %arg9[%c0_94, %c0_95] : memref<8x32xf32, #tpu.memory_space<vmem>>, vector<8x32xf32>
    tpu.vector_store %arg9[%c0_94, %c0_95], %217 {strides = array<i32>} : memref<8x32xf32, #tpu.memory_space<vmem>>, vector<8x32xf32>,
    %219 = math.tanh %217 : vector<8x32xf32>
    %220 = arith.mulf %213, %219 : vector<8x32xf32>
    %c0_96 = arith.constant 0 : index
    %c0_97 = arith.constant 0 : index
    %221 = vector.load %arg8[%c0_96, %c0_97] : memref<8x32xf32, #tpu.memory_space<vmem>>, vector<8x32xf32>
    tpu.vector_store %arg8[%c0_96, %c0_97], %220 {strides = array<i32>} : memref<8x32xf32, #tpu.memory_space<vmem>>, vector<8x32xf32>,
    %c6_i32 = arith.constant 6 : i32
    %c8_i32_98 = arith.constant 8 : i32
    %222 = arith.muli %c6_i32, %c8_i32_98 : i32
    %223 = tpu.assume_multiple %222, 8 : i32
    %224 = arith.index_cast %223 : i32 to index
    %c0_99 = arith.constant 0 : index
    %225 = vector.load %arg7[%224, %c0_99] : memref<64x128xf32, #tpu.memory_space<vmem>>, vector<8x128xf32>
    %c0_100 = arith.constant 0 : index
    %c0_101 = arith.constant 0 : index
    %226 = vector.load %arg8[%c0_100, %c0_101] : memref<8x32xf32, #tpu.memory_space<vmem>>, vector<8x32xf32>
    %cst_102 = arith.constant dense<0.000000e+00> : vector<8x128xf32>
    %227 = tpu.matmul %226, %7, %cst_102 {dimension_numbers = #tpu.dot_dimension_numbers<[1], [0], [0], [1], [0, 0, 1, 1], [], []>} : vector<8x32xf32>, vector<32x128xf32>, vector<8x128xf32> -> vector<8x128xf32>
    %228 = arith.addf %225, %227 : vector<8x128xf32>
    %229 = vector.extract_strided_slice %228 {offsets = [0, 0], sizes = [8, 32], strides = [1, 1]} : vector<8x128xf32> to vector<8x32xf32>
    %230 = arith.negf %229 : vector<8x32xf32>
    %231 = math.exp %230 : vector<8x32xf32>
    %cst_103 = arith.constant 1.000000e+00 : f32
    %232 = vector.broadcast %cst_103 : f32 to vector<8x32xf32>
    %233 = arith.addf %232, %231 : vector<8x32xf32>
    %234 = arith.divf %232, %233 : vector<8x32xf32>
    %235 = vector.extract_strided_slice %228 {offsets = [0, 32], sizes = [8, 32], strides = [1, 1]} : vector<8x128xf32> to vector<8x32xf32>
    %236 = arith.negf %235 : vector<8x32xf32>
    %237 = math.exp %236 : vector<8x32xf32>
    %cst_104 = arith.constant 1.000000e+00 : f32
    %238 = vector.broadcast %cst_104 : f32 to vector<8x32xf32>
    %239 = arith.addf %238, %237 : vector<8x32xf32>
    %240 = arith.divf %238, %239 : vector<8x32xf32>
    %241 = vector.extract_strided_slice %228 {offsets = [0, 64], sizes = [8, 32], strides = [1, 1]} : vector<8x128xf32> to vector<8x32xf32>
    %242 = math.tanh %241 : vector<8x32xf32>
    %243 = vector.extract_strided_slice %228 {offsets = [0, 96], sizes = [8, 32], strides = [1, 1]} : vector<8x128xf32> to vector<8x32xf32>
    %244 = arith.negf %243 : vector<8x32xf32>
    %245 = math.exp %244 : vector<8x32xf32>
    %cst_105 = arith.constant 1.000000e+00 : f32
    %246 = vector.broadcast %cst_105 : f32 to vector<8x32xf32>
    %247 = arith.addf %246, %245 : vector<8x32xf32>
    %248 = arith.divf %246, %247 : vector<8x32xf32>
    %c0_106 = arith.constant 0 : index
    %c0_107 = arith.constant 0 : index
    %249 = vector.load %arg9[%c0_106, %c0_107] : memref<8x32xf32, #tpu.memory_space<vmem>>, vector<8x32xf32>
    %250 = arith.mulf %240, %249 : vector<8x32xf32>
    %251 = arith.mulf %234, %242 : vector<8x32xf32>
    %252 = arith.addf %250, %251 : vector<8x32xf32>
    %c0_108 = arith.constant 0 : index
    %c0_109 = arith.constant 0 : index
    %253 = vector.load %arg9[%c0_108, %c0_109] : memref<8x32xf32, #tpu.memory_space<vmem>>, vector<8x32xf32>
    tpu.vector_store %arg9[%c0_108, %c0_109], %252 {strides = array<i32>} : memref<8x32xf32, #tpu.memory_space<vmem>>, vector<8x32xf32>,
    %254 = math.tanh %252 : vector<8x32xf32>
    %255 = arith.mulf %248, %254 : vector<8x32xf32>
    %c0_110 = arith.constant 0 : index
    %c0_111 = arith.constant 0 : index
    %256 = vector.load %arg8[%c0_110, %c0_111] : memref<8x32xf32, #tpu.memory_space<vmem>>, vector<8x32xf32>
    tpu.vector_store %arg8[%c0_110, %c0_111], %255 {strides = array<i32>} : memref<8x32xf32, #tpu.memory_space<vmem>>, vector<8x32xf32>,
    %c7_i32 = arith.constant 7 : i32
    %c8_i32_112 = arith.constant 8 : i32
    %257 = arith.muli %c7_i32, %c8_i32_112 : i32
    %258 = tpu.assume_multiple %257, 8 : i32
    %259 = arith.index_cast %258 : i32 to index
    %c0_113 = arith.constant 0 : index
    %260 = vector.load %arg7[%259, %c0_113] : memref<64x128xf32, #tpu.memory_space<vmem>>, vector<8x128xf32>
    %c0_114 = arith.constant 0 : index
    %c0_115 = arith.constant 0 : index
    %261 = vector.load %arg8[%c0_114, %c0_115] : memref<8x32xf32, #tpu.memory_space<vmem>>, vector<8x32xf32>
    %cst_116 = arith.constant dense<0.000000e+00> : vector<8x128xf32>
    %262 = tpu.matmul %261, %7, %cst_116 {dimension_numbers = #tpu.dot_dimension_numbers<[1], [0], [0], [1], [0, 0, 1, 1], [], []>} : vector<8x32xf32>, vector<32x128xf32>, vector<8x128xf32> -> vector<8x128xf32>
    %263 = arith.addf %260, %262 : vector<8x128xf32>
    %264 = vector.extract_strided_slice %263 {offsets = [0, 0], sizes = [8, 32], strides = [1, 1]} : vector<8x128xf32> to vector<8x32xf32>
    %265 = arith.negf %264 : vector<8x32xf32>
    %266 = math.exp %265 : vector<8x32xf32>
    %cst_117 = arith.constant 1.000000e+00 : f32
    %267 = vector.broadcast %cst_117 : f32 to vector<8x32xf32>
    %268 = arith.addf %267, %266 : vector<8x32xf32>
    %269 = arith.divf %267, %268 : vector<8x32xf32>
    %270 = vector.extract_strided_slice %263 {offsets = [0, 32], sizes = [8, 32], strides = [1, 1]} : vector<8x128xf32> to vector<8x32xf32>
    %271 = arith.negf %270 : vector<8x32xf32>
    %272 = math.exp %271 : vector<8x32xf32>
    %cst_118 = arith.constant 1.000000e+00 : f32
    %273 = vector.broadcast %cst_118 : f32 to vector<8x32xf32>
    %274 = arith.addf %273, %272 : vector<8x32xf32>
    %275 = arith.divf %273, %274 : vector<8x32xf32>
    %276 = vector.extract_strided_slice %263 {offsets = [0, 64], sizes = [8, 32], strides = [1, 1]} : vector<8x128xf32> to vector<8x32xf32>
    %277 = math.tanh %276 : vector<8x32xf32>
    %278 = vector.extract_strided_slice %263 {offsets = [0, 96], sizes = [8, 32], strides = [1, 1]} : vector<8x128xf32> to vector<8x32xf32>
    %279 = arith.negf %278 : vector<8x32xf32>
    %280 = math.exp %279 : vector<8x32xf32>
    %cst_119 = arith.constant 1.000000e+00 : f32
    %281 = vector.broadcast %cst_119 : f32 to vector<8x32xf32>
    %282 = arith.addf %281, %280 : vector<8x32xf32>
    %283 = arith.divf %281, %282 : vector<8x32xf32>
    %c0_120 = arith.constant 0 : index
    %c0_121 = arith.constant 0 : index
    %284 = vector.load %arg9[%c0_120, %c0_121] : memref<8x32xf32, #tpu.memory_space<vmem>>, vector<8x32xf32>
    %285 = arith.mulf %275, %284 : vector<8x32xf32>
    %286 = arith.mulf %269, %277 : vector<8x32xf32>
    %287 = arith.addf %285, %286 : vector<8x32xf32>
    %c0_122 = arith.constant 0 : index
    %c0_123 = arith.constant 0 : index
    %288 = vector.load %arg9[%c0_122, %c0_123] : memref<8x32xf32, #tpu.memory_space<vmem>>, vector<8x32xf32>
    tpu.vector_store %arg9[%c0_122, %c0_123], %287 {strides = array<i32>} : memref<8x32xf32, #tpu.memory_space<vmem>>, vector<8x32xf32>,
    %289 = math.tanh %287 : vector<8x32xf32>
    %290 = arith.mulf %283, %289 : vector<8x32xf32>
    %c0_124 = arith.constant 0 : index
    %c0_125 = arith.constant 0 : index
    %291 = vector.load %arg8[%c0_124, %c0_125] : memref<8x32xf32, #tpu.memory_space<vmem>>, vector<8x32xf32>
    tpu.vector_store %arg8[%c0_124, %c0_125], %290 {strides = array<i32>} : memref<8x32xf32, #tpu.memory_space<vmem>>, vector<8x32xf32>,
    %c8_i32_126 = arith.constant 8 : i32
    %c0_127 = arith.constant 0 : index
    %c0_128 = arith.constant 0 : index
    %292 = vector.load %arg8[%c0_127, %c0_128] : memref<8x32xf32, #tpu.memory_space<vmem>>, vector<8x32xf32>
    %c0_129 = arith.constant 0 : index
    %c0_130 = arith.constant 0 : index
    %293 = vector.load %arg4[%c0_129, %c0_130] : memref<32x128xf32, #tpu.memory_space<vmem>>, vector<32x128xf32>
    %cst_131 = arith.constant dense<0.000000e+00> : vector<8x128xf32>
    %294 = tpu.matmul %292, %293, %cst_131 {dimension_numbers = #tpu.dot_dimension_numbers<[1], [0], [0], [1], [0, 0, 1, 1], [], []>} : vector<8x32xf32>, vector<32x128xf32>, vector<8x128xf32> -> vector<8x128xf32>
    %c0_132 = arith.constant 0 : index
    %c0_133 = arith.constant 0 : index
    %295 = vector.load %arg5[%c0_132, %c0_133] : memref<1x128xf32, #tpu.memory_space<vmem>>, vector<1x128xf32>
    %296 = vector.broadcast %295 : vector<1x128xf32> to vector<8x128xf32>
    %297 = arith.addf %294, %296 : vector<8x128xf32>
    %c0_134 = arith.constant 0 : index
    %c0_135 = arith.constant 0 : index
    %298 = vector.load %arg6[%c0_134, %c0_135] : memref<8x128xf32, #tpu.memory_space<vmem>>, vector<8x128xf32>
    tpu.vector_store %arg6[%c0_134, %c0_135], %297 {strides = array<i32>} : memref<8x128xf32, #tpu.memory_space<vmem>>, vector<8x128xf32>,
    return
  }
}

</mosaic_0001>

<llo_original>
// kernel: lstm_model_forward.1
$region0: #{lstm_model_forward.1}
  #allocation0 [shape = 'u32[]', space=smem, size = 0x4, offset = 0x4, fixed_abs, tag = 'smem constant byte address 0x4 - core index']
  #allocation1 [shape = 'u32[72,128]{1,0:T(1,128)}', space=vmem, size = 0x9000, scoped, tag = 'internal scratch']
  #allocation2 [shape = 'f32[64,128]{1,0:T(8,128)}', space=vmem, size = 0x8000, scoped, tag = 'scratch operand']
  #allocation3 [shape = 'f32[8,32]{1,0:T(8,128)}', space=vmem, size = 0x1000, scoped, tag = 'scratch operand']
  #allocation4 [shape = 'f32[8,32]{1,0:T(8,128)}', space=vmem, size = 0x1000, scoped, tag = 'scratch operand']
  %s0 = inlined_call_operand.vmem [shape: f32[64,16], index: 0, kind: input, shape index: {}]
  %s1 = inlined_call_operand.vmem [shape: f32[16,128], index: 1, kind: input, shape index: {}]
  %s2 = inlined_call_operand.vmem [shape: f32[32,128], index: 2, kind: input, shape index: {}]
  %s3 = inlined_call_operand.vmem [shape: f32[1,128], index: 3, kind: input, shape index: {}]
  %s4 = inlined_call_operand.vmem [shape: f32[32,128], index: 4, kind: input, shape index: {}]
  %s5 = inlined_call_operand.vmem [shape: f32[1,128], index: 5, kind: input, shape index: {}]
  %s6 = inlined_call_operand.vmem [shape: f32[8,128], index: 6, kind: output, shape index: {}]
  %s7 = sld [smem:[#allocation0]]
  $region34: #{lstm_model_forward.1} parent=0
    _
  %s9 = ssub.s32 1, %s7
  %s10 = scalar_select 0, %s9, %s7
  // Predicated region
  $region2: #{lstm_model_forward.1} parent=0 // pred_check
    _
  $region3: #{lstm_model_forward.1} parent=0 // pred_check_branch
    %12 = sbr.rel (0) target = $region5
  $region4: #{lstm_model_forward.1} parent=0 // pred_region
    _
  $region5: #{lstm_model_forward.1} parent=0 // pred_fallthru
    _
  // Predicated region
  $region6: #{lstm_model_forward.1} parent=0 // pred_check
    _
  $region7: #{lstm_model_forward.1} parent=0 // pred_check_branch
    %14 = sbr.rel (0) target = $region9
  $region8: #{lstm_model_forward.1} parent=0 // pred_region
    _
  $region9: #{lstm_model_forward.1} parent=0 // pred_fallthru
    _
  // Predicated region
  $region10: #{lstm_model_forward.1} parent=0 // pred_check
    _
  $region11: #{lstm_model_forward.1} parent=0 // pred_check_branch
    %16 = sbr.rel (0) target = $region13
  $region12: #{lstm_model_forward.1} parent=0 // pred_region
    _
  $region13: #{lstm_model_forward.1} parent=0 // pred_fallthru
    _
  // Predicated region
  $region14: #{lstm_model_forward.1} parent=0 // pred_check
    _
  $region15: #{lstm_model_forward.1} parent=0 // pred_check_branch
    %18 = sbr.rel (0) target = $region17
  $region16: #{lstm_model_forward.1} parent=0 // pred_region
    _
  $region17: #{lstm_model_forward.1} parent=0 // pred_fallthru
    _
  // Predicated region
  $region18: #{lstm_model_forward.1} parent=0 // pred_check
    _
  $region19: #{lstm_model_forward.1} parent=0 // pred_check_branch
    %20 = sbr.rel (0) target = $region21
  $region20: #{lstm_model_forward.1} parent=0 // pred_region
    _
  $region21: #{lstm_model_forward.1} parent=0 // pred_fallthru
    _
  // Predicated region
  $region22: #{lstm_model_forward.1} parent=0 // pred_check
    _
  $region23: #{lstm_model_forward.1} parent=0 // pred_check_branch
    %22 = sbr.rel (0) target = $region25
  $region24: #{lstm_model_forward.1} parent=0 // pred_region
    _
  $region25: #{lstm_model_forward.1} parent=0 // pred_fallthru
    _
  %v23 = vld [vmem:[%s0] sm:$0xff]
  %v24 = vld [vmem:[%s0 + $0x8] sm:$0xff]
  %v25 = vld [vmem:[%s0 + $0x10] sm:$0xff]
  %v26 = vld [vmem:[%s0 + $0x18] sm:$0xff]
  %v27 = vld [vmem:[%s0 + $0x20] sm:$0xff]
  %v28 = vld [vmem:[%s0 + $0x28] sm:$0xff]
  %v29 = vld [vmem:[%s0 + $0x30] sm:$0xff]
  %v30 = vld [vmem:[%s0 + $0x38] sm:$0xff]
  %v31 = vld [vmem:[%s1] sm:$0xff]
  %v32 = vld [vmem:[%s1 + $0x8] sm:$0xff]
  %v33 = vld [vmem:[%s3] sm:$0x1]
  %v35 = vperm.slane %v33, 0
  %vm37 = vcmask 130048
  %v39 = vsel %vm37, %v23, 0
  %v42 = vsel %vm37, %v24, 0
  %v45 = vsel %vm37, %v25, 0
  %v48 = vsel %vm37, %v26, 0
  %v51 = vsel %vm37, %v27, 0
  %v54 = vsel %vm37, %v28, 0
  %v57 = vsel %vm37, %v29, 0
  %v60 = vsel %vm37, %v30, 0
  %62 = vmatpush.msra.mxu0 0.0
  %63 = vmatpush.msra.mxu0 0.0
  %64 = vmatpush.msra.mxu0 0.0
  %65 = vmatpush.msra.mxu0 0.0
  %66 = vmatpush.msra.mxu0 0.0
  %67 = vmatpush.msra.mxu0 0.0
  %68 = vmatpush.msra.mxu0 0.0
  %69 = vmatpush.msra.mxu0 0.0
  %70 = vmatpush.msra.mxu0 0.0
  %71 = vmatpush.msra.mxu0 0.0
  %72 = vmatpush.msra.mxu0 0.0
  %73 = vmatpush.msra.mxu0 0.0
  %74 = vmatpush.msra.mxu0 0.0
  %75 = vmatpush.msra.mxu0 0.0
  %76 = vmatpush.msra.mxu0 %v32
  %77 = vmatpush.msra.mxu0 %v31
  %78 = vmatmul.f32.gmra.mxu0 %v39
  %v79 = vpop.f32.mrf.mxu0
  %v80 = vadd.f32 %v35, %v79
  %81 = vmatmul.f32.gmra.mxu0 %v42
  %v82 = vpop.f32.mrf.mxu0
  %v83 = vadd.f32 %v35, %v82
  %84 = vmatmul.f32.gmra.mxu0 %v45
  %v85 = vpop.f32.mrf.mxu0
  %v86 = vadd.f32 %v35, %v85
  %87 = vmatmul.f32.gmra.mxu0 %v48
  %v88 = vpop.f32.mrf.mxu0
  %v89 = vadd.f32 %v35, %v88
  %90 = vmatmul.f32.gmra.mxu0 %v51
  %v91 = vpop.f32.mrf.mxu0
  %v92 = vadd.f32 %v35, %v91
  %93 = vmatmul.f32.gmra.mxu0 %v54
  %v94 = vpop.f32.mrf.mxu0
  %v95 = vadd.f32 %v35, %v94
  %96 = vmatmul.f32.gmra.mxu0 %v57
  %v97 = vpop.f32.mrf.mxu0
  %v98 = vadd.f32 %v35, %v97
  %99 = vmatmul.f32.gmra.mxu0 %v60
  %v100 = vpop.f32.mrf.mxu0
  %v101 = vadd.f32 %v35, %v100
  %102 = vdwg.mxu0
  %103 = vst [vmem:[#allocation2] sm:$0xff] %v80
  %104 = vst [vmem:[#allocation2 + $0x8] sm:$0xff] %v83
  %105 = vst [vmem:[#allocation2 + $0x10] sm:$0xff] %v86
  %106 = vst [vmem:[#allocation2 + $0x18] sm:$0xff] %v89
  %107 = vst [vmem:[#allocation2 + $0x20] sm:$0xff] %v92
  %108 = vst [vmem:[#allocation2 + $0x28] sm:$0xff] %v95
  %109 = vst [vmem:[#allocation2 + $0x30] sm:$0xff] %v98
  %110 = vst [vmem:[#allocation2 + $0x38] sm:$0xff] %v101
  %v111 = vld [vmem:[%s2] sm:$0xff]
  %v112 = vld [vmem:[%s2 + $0x8] sm:$0xff]
  %v113 = vld [vmem:[%s2 + $0x10] sm:$0xff]
  %v114 = vld [vmem:[%s2 + $0x18] sm:$0xff]
  %vm115 = vcmask 261120
  %116 = vst.msk [vmem:[#allocation3] sm:$0xff] %vm115, 0.0
  %117 = vst.msk [vmem:[#allocation4] sm:$0xff] %vm115, 0.0
  %v118 = vld [vmem:[#allocation2] sm:$0xff]
  %v119 = vld [vmem:[#allocation3] sm:$0xff]
  %v121 = vsel %vm115, %v119, 0
  %123 = vmatpush.msra.mxu0 0.0
  %124 = vmatpush.msra.mxu0 0.0
  %125 = vmatpush.msra.mxu0 0.0
  %126 = vmatpush.msra.mxu0 0.0
  %127 = vmatpush.msra.mxu0 0.0
  %128 = vmatpush.msra.mxu0 0.0
  %129 = vmatpush.msra.mxu0 0.0
  %130 = vmatpush.msra.mxu0 0.0
  %131 = vmatpush.msra.mxu0 0.0
  %132 = vmatpush.msra.mxu0 0.0
  %133 = vmatpush.msra.mxu0 0.0
  %134 = vmatpush.msra.mxu0 0.0
  %135 = vmatpush.msra.mxu0 %v114
  %136 = vmatpush.msra.mxu0 %v113
  %137 = vmatpush.msra.mxu0 %v112
  %138 = vmatpush.msra.mxu0 %v111
  %139 = vmatmul.f32.gmra.mxu0 %v121
  %v140 = vpop.f32.mrf.mxu0
  %v141 = vadd.f32 0.0, %v140
  %142 = vdwg.mxu0
  %v143 = vadd.f32 %v118, %v141
  %v144 = vxor.u32 %v143, 2147483648
  %v145 = vmul.f32 %v144, 1.442695
  %v146 = vpow.pop %v145
  %v147 = vadd.f32 %v146, 1.0
  %v148 = vrcp.pop %v147
  %v149 = vmul.f32 %v147, %v148
  %v150 = vsub.f32 1.0, %v149
  %v151 = vmul.f32 %v148, %v150
  %v152 = vadd.f32 %v148, %v151
  %vm153 = vweird.f32 %v147
  %vm154 = vweird.f32 %v148
  %vm155 = vmor %vm153, %vm154
  %v156 = vsel %vm155, %v148, %v152
  %v157 = vand.u32 2147483647, %v147
  %vm158 = vcmp.eq.f32.partialorder %v157, 8.507059e+37
  %v159 = vand.u32 %v147, 2147483648
  %v160 = vor.u32 1.1754944e-38, %v159
  %v161 = vsel %vm158, %v160, %v156
  %v162 = vmul.f32 1.0, %v161
  %v163 = vtanh.pop %v143
  %v164 = vld [vmem:[#allocation4] sm:$0xff]
  %166 = vrot.lane.b32.xlu0 %v164, 32
  %v167 = vpop.permute.xlu0 %166
  %v169 = vmul.f32 %v162, %v167
  %171 = vrot.lane.b32.xlu0 %v163, 64
  %v172 = vpop.permute.xlu0 %171
  %v174 = vmul.f32 %v162, %v172
  %176 = vrot.lane.b32.xlu0 %v174, 32
  %v177 = vpop.permute.xlu0 %176
  %v179 = vadd.f32 %v169, %v177
  %181 = vrot.lane.b32.xlu0 %v179, 96
  %v182 = vpop.permute.xlu0 %181
  %184 = vst.msk [vmem:[#allocation4] sm:$0xff] %vm115, %v182
  %v185 = vtanh.pop %v179
  %187 = vrot.lane.b32.xlu0 %v185, 64
  %v188 = vpop.permute.xlu0 %187
  %v190 = vmul.f32 %v162, %v188
  %192 = vrot.lane.b32.xlu0 %v190, 32
  %v193 = vpop.permute.xlu0 %192
  %195 = vst.msk [vmem:[#allocation3] sm:$0xff] %vm115, %v193
  %s196 = scalar_lea.vmem [#allocation2], 8
  %v197 = vld [vmem:[%s196] sm:$0xff]
  %v198 = vld [vmem:[#allocation3] sm:$0xff]
  %v200 = vsel %vm115, %v198, 0
  %202 = vmatpush.msra.mxu0 0.0
  %203 = vmatpush.msra.mxu0 0.0
  %204 = vmatpush.msra.mxu0 0.0
  %205 = vmatpush.msra.mxu0 0.0
  %206 = vmatpush.msra.mxu0 0.0
  %207 = vmatpush.msra.mxu0 0.0
  %208 = vmatpush.msra.mxu0 0.0
  %209 = vmatpush.msra.mxu0 0.0
  %210 = vmatpush.msra.mxu0 0.0
  %211 = vmatpush.msra.mxu0 0.0
  %212 = vmatpush.msra.mxu0 0.0
  %213 = vmatpush.msra.mxu0 0.0
  %214 = vmatpush.msra.mxu0 %v114
  %215 = vmatpush.msra.mxu0 %v113
  %216 = vmatpush.msra.mxu0 %v112
  %217 = vmatpush.msra.mxu0 %v111
  %218 = vmatmul.f32.gmra.mxu0 %v200
  %v219 = vpop.f32.mrf.mxu0
  %v220 = vadd.f32 0.0, %v219
  %221 = vdwg.mxu0
  %v222 = vadd.f32 %v197, %v220
  %v223 = vxor.u32 %v222, 2147483648
  %v224 = vmul.f32 %v223, 1.442695
  %v225 = vpow.pop %v224
  %v226 = vadd.f32 %v225, 1.0
  %v227 = vrcp.pop %v226
  %v228 = vmul.f32 %v226, %v227
  %v229 = vsub.f32 1.0, %v228
  %v230 = vmul.f32 %v227, %v229
  %v231 = vadd.f32 %v227, %v230
  %vm232 = vweird.f32 %v226
  %vm233 = vweird.f32 %v227
  %vm234 = vmor %vm232, %vm233
  %v235 = vsel %vm234, %v227, %v231
  %v236 = vand.u32 2147483647, %v226
  %vm237 = vcmp.eq.f32.partialorder %v236, 8.507059e+37
  %v238 = vand.u32 %v226, 2147483648
  %v239 = vor.u32 1.1754944e-38, %v238
  %v240 = vsel %vm237, %v239, %v235
  %v241 = vmul.f32 1.0, %v240
  %v242 = vtanh.pop %v222
  %v243 = vld [vmem:[#allocation4] sm:$0xff]
  %245 = vrot.lane.b32.xlu0 %v243, 32
  %v246 = vpop.permute.xlu0 %245
  %v248 = vmul.f32 %v241, %v246
  %250 = vrot.lane.b32.xlu0 %v242, 64
  %v251 = vpop.permute.xlu0 %250
  %v253 = vmul.f32 %v241, %v251
  %255 = vrot.lane.b32.xlu0 %v253, 32
  %v256 = vpop.permute.xlu0 %255
  %v258 = vadd.f32 %v248, %v256
  %260 = vrot.lane.b32.xlu0 %v258, 96
  %v261 = vpop.permute.xlu0 %260
  %263 = vst.msk [vmem:[#allocation4] sm:$0xff] %vm115, %v261
  %v264 = vtanh.pop %v258
  %266 = vrot.lane.b32.xlu0 %v264, 64
  %v267 = vpop.permute.xlu0 %266
  %v269 = vmul.f32 %v241, %v267
  %271 = vrot.lane.b32.xlu0 %v269, 32
  %v272 = vpop.permute.xlu0 %271
  %274 = vst.msk [vmem:[#allocation3] sm:$0xff] %vm115, %v272
  %s275 = scalar_lea.vmem [#allocation2], 16
  %v276 = vld [vmem:[%s275] sm:$0xff]
  %v277 = vld [vmem:[#allocation3] sm:$0xff]
  %v279 = vsel %vm115, %v277, 0
  %281 = vmatpush.msra.mxu0 0.0
  %282 = vmatpush.msra.mxu0 0.0
  %283 = vmatpush.msra.mxu0 0.0
  %284 = vmatpush.msra.mxu0 0.0
  %285 = vmatpush.msra.mxu0 0.0
  %286 = vmatpush.msra.mxu0 0.0
  %287 = vmatpush.msra.mxu0 0.0
  %288 = vmatpush.msra.mxu0 0.0
  %289 = vmatpush.msra.mxu0 0.0
  %290 = vmatpush.msra.mxu0 0.0
  %291 = vmatpush.msra.mxu0 0.0
  %292 = vmatpush.msra.mxu0 0.0
  %293 = vmatpush.msra.mxu0 %v114
  %294 = vmatpush.msra.mxu0 %v113
  %295 = vmatpush.msra.mxu0 %v112
  %296 = vmatpush.msra.mxu0 %v111
  %297 = vmatmul.f32.gmra.mxu0 %v279
  %v298 = vpop.f32.mrf.mxu0
  %v299 = vadd.f32 0.0, %v298
  %300 = vdwg.mxu0
  %v301 = vadd.f32 %v276, %v299
  %v302 = vxor.u32 %v301, 2147483648
  %v303 = vmul.f32 %v302, 1.442695
  %v304 = vpow.pop %v303
  %v305 = vadd.f32 %v304, 1.0
  %v306 = vrcp.pop %v305
  %v307 = vmul.f32 %v305, %v306
  %v308 = vsub.f32 1.0, %v307
  %v309 = vmul.f32 %v306, %v308
  %v310 = vadd.f32 %v306, %v309
  %vm311 = vweird.f32 %v305
  %vm312 = vweird.f32 %v306
  %vm313 = vmor %vm311, %vm312
  %v314 = vsel %vm313, %v306, %v310
  %v315 = vand.u32 2147483647, %v305
  %vm316 = vcmp.eq.f32.partialorder %v315, 8.507059e+37
  %v317 = vand.u32 %v305, 2147483648
  %v318 = vor.u32 1.1754944e-38, %v317
  %v319 = vsel %vm316, %v318, %v314
  %v320 = vmul.f32 1.0, %v319
  %v321 = vtanh.pop %v301
  %v322 = vld [vmem:[#allocation4] sm:$0xff]
  %324 = vrot.lane.b32.xlu0 %v322, 32
  %v325 = vpop.permute.xlu0 %324
  %v327 = vmul.f32 %v320, %v325
  %329 = vrot.lane.b32.xlu0 %v321, 64
  %v330 = vpop.permute.xlu0 %329
  %v332 = vmul.f32 %v320, %v330
  %334 = vrot.lane.b32.xlu0 %v332, 32
  %v335 = vpop.permute.xlu0 %334
  %v337 = vadd.f32 %v327, %v335
  %339 = vrot.lane.b32.xlu0 %v337, 96
  %v340 = vpop.permute.xlu0 %339
  %342 = vst.msk [vmem:[#allocation4] sm:$0xff] %vm115, %v340
  %v343 = vtanh.pop %v337
  %345 = vrot.lane.b32.xlu0 %v343, 64
  %v346 = vpop.permute.xlu0 %345
  %v348 = vmul.f32 %v320, %v346
  %350 = vrot.lane.b32.xlu0 %v348, 32
  %v351 = vpop.permute.xlu0 %350
  %353 = vst.msk [vmem:[#allocation3] sm:$0xff] %vm115, %v351
  %s354 = scalar_lea.vmem [#allocation2], 24
  %v355 = vld [vmem:[%s354] sm:$0xff]
  %v356 = vld [vmem:[#allocation3] sm:$0xff]
  %v358 = vsel %vm115, %v356, 0
  %360 = vmatpush.msra.mxu0 0.0
  %361 = vmatpush.msra.mxu0 0.0
  %362 = vmatpush.msra.mxu0 0.0
  %363 = vmatpush.msra.mxu0 0.0
  %364 = vmatpush.msra.mxu0 0.0
  %365 = vmatpush.msra.mxu0 0.0
  %366 = vmatpush.msra.mxu0 0.0
  %367 = vmatpush.msra.mxu0 0.0
  %368 = vmatpush.msra.mxu0 0.0
  %369 = vmatpush.msra.mxu0 0.0
  %370 = vmatpush.msra.mxu0 0.0
  %371 = vmatpush.msra.mxu0 0.0
  %372 = vmatpush.msra.mxu0 %v114
  %373 = vmatpush.msra.mxu0 %v113
  %374 = vmatpush.msra.mxu0 %v112
  %375 = vmatpush.msra.mxu0 %v111
  %376 = vmatmul.f32.gmra.mxu0 %v358
  %v377 = vpop.f32.mrf.mxu0
  %v378 = vadd.f32 0.0, %v377
  %379 = vdwg.mxu0
  %v380 = vadd.f32 %v355, %v378
  %v381 = vxor.u32 %v380, 2147483648
  %v382 = vmul.f32 %v381, 1.442695
  %v383 = vpow.pop %v382
  %v384 = vadd.f32 %v383, 1.0
  %v385 = vrcp.pop %v384
  %v386 = vmul.f32 %v384, %v385
  %v387 = vsub.f32 1.0, %v386
  %v388 = vmul.f32 %v385, %v387
  %v389 = vadd.f32 %v385, %v388
  %vm390 = vweird.f32 %v384
  %vm391 = vweird.f32 %v385
  %vm392 = vmor %vm390, %vm391
  %v393 = vsel %vm392, %v385, %v389
  %v394 = vand.u32 2147483647, %v384
  %vm395 = vcmp.eq.f32.partialorder %v394, 8.507059e+37
  %v396 = vand.u32 %v384, 2147483648
  %v397 = vor.u32 1.1754944e-38, %v396
  %v398 = vsel %vm395, %v397, %v393
  %v399 = vmul.f32 1.0, %v398
  %v400 = vtanh.pop %v380
  %v401 = vld [vmem:[#allocation4] sm:$0xff]
  %403 = vrot.lane.b32.xlu0 %v401, 32
  %v404 = vpop.permute.xlu0 %403
  %v406 = vmul.f32 %v399, %v404
  %408 = vrot.lane.b32.xlu0 %v400, 64
  %v409 = vpop.permute.xlu0 %408
  %v411 = vmul.f32 %v399, %v409
  %413 = vrot.lane.b32.xlu0 %v411, 32
  %v414 = vpop.permute.xlu0 %413
  %v416 = vadd.f32 %v406, %v414
  %418 = vrot.lane.b32.xlu0 %v416, 96
  %v419 = vpop.permute.xlu0 %418
  %421 = vst.msk [vmem:[#allocation4] sm:$0xff] %vm115, %v419
  %v422 = vtanh.pop %v416
  %424 = vrot.lane.b32.xlu0 %v422, 64
  %v425 = vpop.permute.xlu0 %424
  %v427 = vmul.f32 %v399, %v425
  %429 = vrot.lane.b32.xlu0 %v427, 32
  %v430 = vpop.permute.xlu0 %429
  %432 = vst.msk [vmem:[#allocation3] sm:$0xff] %vm115, %v430
  %s433 = scalar_lea.vmem [#allocation2], 32
  %v434 = vld [vmem:[%s433] sm:$0xff]
  %v435 = vld [vmem:[#allocation3] sm:$0xff]
  %v437 = vsel %vm115, %v435, 0
  %439 = vmatpush.msra.mxu0 0.0
  %440 = vmatpush.msra.mxu0 0.0
  %441 = vmatpush.msra.mxu0 0.0
  %442 = vmatpush.msra.mxu0 0.0
  %443 = vmatpush.msra.mxu0 0.0
  %444 = vmatpush.msra.mxu0 0.0
  %445 = vmatpush.msra.mxu0 0.0
  %446 = vmatpush.msra.mxu0 0.0
  %447 = vmatpush.msra.mxu0 0.0
  %448 = vmatpush.msra.mxu0 0.0
  %449 = vmatpush.msra.mxu0 0.0
  %450 = vmatpush.msra.mxu0 0.0
  %451 = vmatpush.msra.mxu0 %v114
  %452 = vmatpush.msra.mxu0 %v113
  %453 = vmatpush.msra.mxu0 %v112
  %454 = vmatpush.msra.mxu0 %v111
  %455 = vmatmul.f32.gmra.mxu0 %v437
  %v456 = vpop.f32.mrf.mxu0
  %v457 = vadd.f32 0.0, %v456
  %458 = vdwg.mxu0
  %v459 = vadd.f32 %v434, %v457
  %v460 = vxor.u32 %v459, 2147483648
  %v461 = vmul.f32 %v460, 1.442695
  %v462 = vpow.pop %v461
  %v463 = vadd.f32 %v462, 1.0
  %v464 = vrcp.pop %v463
  %v465 = vmul.f32 %v463, %v464
  %v466 = vsub.f32 1.0, %v465
  %v467 = vmul.f32 %v464, %v466
  %v468 = vadd.f32 %v464, %v467
  %vm469 = vweird.f32 %v463
  %vm470 = vweird.f32 %v464
  %vm471 = vmor %vm469, %vm470
  %v472 = vsel %vm471, %v464, %v468
  %v473 = vand.u32 2147483647, %v463
  %vm474 = vcmp.eq.f32.partialorder %v473, 8.507059e+37
  %v475 = vand.u32 %v463, 2147483648
  %v476 = vor.u32 1.1754944e-38, %v475
  %v477 = vsel %vm474, %v476, %v472
  %v478 = vmul.f32 1.0, %v477
  %v479 = vtanh.pop %v459
  %v480 = vld [vmem:[#allocation4] sm:$0xff]
  %482 = vrot.lane.b32.xlu0 %v480, 32
  %v483 = vpop.permute.xlu0 %482
  %v485 = vmul.f32 %v478, %v483
  %487 = vrot.lane.b32.xlu0 %v479, 64
  %v488 = vpop.permute.xlu0 %487
  %v490 = vmul.f32 %v478, %v488
  %492 = vrot.lane.b32.xlu0 %v490, 32
  %v493 = vpop.permute.xlu0 %492
  %v495 = vadd.f32 %v485, %v493
  %497 = vrot.lane.b32.xlu0 %v495, 96
  %v498 = vpop.permute.xlu0 %497
  %500 = vst.msk [vmem:[#allocation4] sm:$0xff] %vm115, %v498
  %v501 = vtanh.pop %v495
  %503 = vrot.lane.b32.xlu0 %v501, 64
  %v504 = vpop.permute.xlu0 %503
  %v506 = vmul.f32 %v478, %v504
  %508 = vrot.lane.b32.xlu0 %v506, 32
  %v509 = vpop.permute.xlu0 %508
  %511 = vst.msk [vmem:[#allocation3] sm:$0xff] %vm115, %v509
  %s512 = scalar_lea.vmem [#allocation2], 40
  %v513 = vld [vmem:[%s512] sm:$0xff]
  %v514 = vld [vmem:[#allocation3] sm:$0xff]
  %v516 = vsel %vm115, %v514, 0
  %518 = vmatpush.msra.mxu0 0.0
  %519 = vmatpush.msra.mxu0 0.0
  %520 = vmatpush.msra.mxu0 0.0
  %521 = vmatpush.msra.mxu0 0.0
  %522 = vmatpush.msra.mxu0 0.0
  %523 = vmatpush.msra.mxu0 0.0
  %524 = vmatpush.msra.mxu0 0.0
  %525 = vmatpush.msra.mxu0 0.0
  %526 = vmatpush.msra.mxu0 0.0
  %527 = vmatpush.msra.mxu0 0.0
  %528 = vmatpush.msra.mxu0 0.0
  %529 = vmatpush.msra.mxu0 0.0
  %530 = vmatpush.msra.mxu0 %v114
  %531 = vmatpush.msra.mxu0 %v113
  %532 = vmatpush.msra.mxu0 %v112
  %533 = vmatpush.msra.mxu0 %v111
  %534 = vmatmul.f32.gmra.mxu0 %v516
  %v535 = vpop.f32.mrf.mxu0
  %v536 = vadd.f32 0.0, %v535
  %537 = vdwg.mxu0
  %v538 = vadd.f32 %v513, %v536
  %v539 = vxor.u32 %v538, 2147483648
  %v540 = vmul.f32 %v539, 1.442695
  %v541 = vpow.pop %v540
  %v542 = vadd.f32 %v541, 1.0
  %v543 = vrcp.pop %v542
  %v544 = vmul.f32 %v542, %v543
  %v545 = vsub.f32 1.0, %v544
  %v546 = vmul.f32 %v543, %v545
  %v547 = vadd.f32 %v543, %v546
  %vm548 = vweird.f32 %v542
  %vm549 = vweird.f32 %v543
  %vm550 = vmor %vm548, %vm549
  %v551 = vsel %vm550, %v543, %v547
  %v552 = vand.u32 2147483647, %v542
  %vm553 = vcmp.eq.f32.partialorder %v552, 8.507059e+37
  %v554 = vand.u32 %v542, 2147483648
  %v555 = vor.u32 1.1754944e-38, %v554
  %v556 = vsel %vm553, %v555, %v551
  %v557 = vmul.f32 1.0, %v556
  %v558 = vtanh.pop %v538
  %v559 = vld [vmem:[#allocation4] sm:$0xff]
  %561 = vrot.lane.b32.xlu0 %v559, 32
  %v562 = vpop.permute.xlu0 %561
  %v564 = vmul.f32 %v557, %v562
  %566 = vrot.lane.b32.xlu0 %v558, 64
  %v567 = vpop.permute.xlu0 %566
  %v569 = vmul.f32 %v557, %v567
  %571 = vrot.lane.b32.xlu0 %v569, 32
  %v572 = vpop.permute.xlu0 %571
  %v574 = vadd.f32 %v564, %v572
  %576 = vrot.lane.b32.xlu0 %v574, 96
  %v577 = vpop.permute.xlu0 %576
  %579 = vst.msk [vmem:[#allocation4] sm:$0xff] %vm115, %v577
  %v580 = vtanh.pop %v574
  %582 = vrot.lane.b32.xlu0 %v580, 64
  %v583 = vpop.permute.xlu0 %582
  %v585 = vmul.f32 %v557, %v583
  %587 = vrot.lane.b32.xlu0 %v585, 32
  %v588 = vpop.permute.xlu0 %587
  %590 = vst.msk [vmem:[#allocation3] sm:$0xff] %vm115, %v588
  %s591 = scalar_lea.vmem [#allocation2], 48
  %v592 = vld [vmem:[%s591] sm:$0xff]
  %v593 = vld [vmem:[#allocation3] sm:$0xff]
  %v595 = vsel %vm115, %v593, 0
  %597 = vmatpush.msra.mxu0 0.0
  %598 = vmatpush.msra.mxu0 0.0
  %599 = vmatpush.msra.mxu0 0.0
  %600 = vmatpush.msra.mxu0 0.0
  %601 = vmatpush.msra.mxu0 0.0
  %602 = vmatpush.msra.mxu0 0.0
  %603 = vmatpush.msra.mxu0 0.0
  %604 = vmatpush.msra.mxu0 0.0
  %605 = vmatpush.msra.mxu0 0.0
  %606 = vmatpush.msra.mxu0 0.0
  %607 = vmatpush.msra.mxu0 0.0
  %608 = vmatpush.msra.mxu0 0.0
  %609 = vmatpush.msra.mxu0 %v114
  %610 = vmatpush.msra.mxu0 %v113
  %611 = vmatpush.msra.mxu0 %v112
  %612 = vmatpush.msra.mxu0 %v111
  %613 = vmatmul.f32.gmra.mxu0 %v595
  %v614 = vpop.f32.mrf.mxu0
  %v615 = vadd.f32 0.0, %v614
  %616 = vdwg.mxu0
  %v617 = vadd.f32 %v592, %v615
  %v618 = vxor.u32 %v617, 2147483648
  %v619 = vmul.f32 %v618, 1.442695
  %v620 = vpow.pop %v619
  %v621 = vadd.f32 %v620, 1.0
  %v622 = vrcp.pop %v621
  %v623 = vmul.f32 %v621, %v622
  %v624 = vsub.f32 1.0, %v623
  %v625 = vmul.f32 %v622, %v624
  %v626 = vadd.f32 %v622, %v625
  %vm627 = vweird.f32 %v621
  %vm628 = vweird.f32 %v622
  %vm629 = vmor %vm627, %vm628
  %v630 = vsel %vm629, %v622, %v626
  %v631 = vand.u32 2147483647, %v621
  %vm632 = vcmp.eq.f32.partialorder %v631, 8.507059e+37
  %v633 = vand.u32 %v621, 2147483648
  %v634 = vor.u32 1.1754944e-38, %v633
  %v635 = vsel %vm632, %v634, %v630
  %v636 = vmul.f32 1.0, %v635
  %v637 = vtanh.pop %v617
  %v638 = vld [vmem:[#allocation4] sm:$0xff]
  %640 = vrot.lane.b32.xlu0 %v638, 32
  %v641 = vpop.permute.xlu0 %640
  %v643 = vmul.f32 %v636, %v641
  %645 = vrot.lane.b32.xlu0 %v637, 64
  %v646 = vpop.permute.xlu0 %645
  %v648 = vmul.f32 %v636, %v646
  %650 = vrot.lane.b32.xlu0 %v648, 32
  %v651 = vpop.permute.xlu0 %650
  %v653 = vadd.f32 %v643, %v651
  %655 = vrot.lane.b32.xlu0 %v653, 96
  %v656 = vpop.permute.xlu0 %655
  %658 = vst.msk [vmem:[#allocation4] sm:$0xff] %vm115, %v656
  %v659 = vtanh.pop %v653
  %661 = vrot.lane.b32.xlu0 %v659, 64
  %v662 = vpop.permute.xlu0 %661
  %v664 = vmul.f32 %v636, %v662
  %666 = vrot.lane.b32.xlu0 %v664, 32
  %v667 = vpop.permute.xlu0 %666
  %669 = vst.msk [vmem:[#allocation3] sm:$0xff] %vm115, %v667
  %s670 = scalar_lea.vmem [#allocation2], 56
  %v671 = vld [vmem:[%s670] sm:$0xff]
  %v672 = vld [vmem:[#allocation3] sm:$0xff]
  %v674 = vsel %vm115, %v672, 0
  %676 = vmatpush.msra.mxu0 0.0
  %677 = vmatpush.msra.mxu0 0.0
  %678 = vmatpush.msra.mxu0 0.0
  %679 = vmatpush.msra.mxu0 0.0
  %680 = vmatpush.msra.mxu0 0.0
  %681 = vmatpush.msra.mxu0 0.0
  %682 = vmatpush.msra.mxu0 0.0
  %683 = vmatpush.msra.mxu0 0.0
  %684 = vmatpush.msra.mxu0 0.0
  %685 = vmatpush.msra.mxu0 0.0
  %686 = vmatpush.msra.mxu0 0.0
  %687 = vmatpush.msra.mxu0 0.0
  %688 = vmatpush.msra.mxu0 %v114
  %689 = vmatpush.msra.mxu0 %v113
  %690 = vmatpush.msra.mxu0 %v112
  %691 = vmatpush.msra.mxu0 %v111
  %692 = vmatmul.f32.gmra.mxu0 %v674
  %v693 = vpop.f32.mrf.mxu0
  %v694 = vadd.f32 0.0, %v693
  %695 = vdwg.mxu0
  %v696 = vadd.f32 %v671, %v694
  %v697 = vxor.u32 %v696, 2147483648
  %v698 = vmul.f32 %v697, 1.442695
  %v699 = vpow.pop %v698
  %v700 = vadd.f32 %v699, 1.0
  %v701 = vrcp.pop %v700
  %v702 = vmul.f32 %v700, %v701
  %v703 = vsub.f32 1.0, %v702
  %v704 = vmul.f32 %v701, %v703
  %v705 = vadd.f32 %v701, %v704
  %vm706 = vweird.f32 %v700
  %vm707 = vweird.f32 %v701
  %vm708 = vmor %vm706, %vm707
  %v709 = vsel %vm708, %v701, %v705
  %v710 = vand.u32 2147483647, %v700
  %vm711 = vcmp.eq.f32.partialorder %v710, 8.507059e+37
  %v712 = vand.u32 %v700, 2147483648
  %v713 = vor.u32 1.1754944e-38, %v712
  %v714 = vsel %vm711, %v713, %v709
  %v715 = vmul.f32 1.0, %v714
  %v716 = vtanh.pop %v696
  %v717 = vld [vmem:[#allocation4] sm:$0xff]
  %719 = vrot.lane.b32.xlu0 %v717, 32
  %v720 = vpop.permute.xlu0 %719
  %v722 = vmul.f32 %v715, %v720
  %724 = vrot.lane.b32.xlu0 %v716, 64
  %v725 = vpop.permute.xlu0 %724
  %v727 = vmul.f32 %v715, %v725
  %729 = vrot.lane.b32.xlu0 %v727, 32
  %v730 = vpop.permute.xlu0 %729
  %v732 = vadd.f32 %v722, %v730
  %734 = vrot.lane.b32.xlu0 %v732, 96
  %v735 = vpop.permute.xlu0 %734
  %737 = vst.msk [vmem:[#allocation4] sm:$0xff] %vm115, %v735
  %v738 = vtanh.pop %v732
  %740 = vrot.lane.b32.xlu0 %v738, 64
  %v741 = vpop.permute.xlu0 %740
  %v743 = vmul.f32 %v715, %v741
  %745 = vrot.lane.b32.xlu0 %v743, 32
  %v746 = vpop.permute.xlu0 %745
  %748 = vst.msk [vmem:[#allocation3] sm:$0xff] %vm115, %v746
  %v749 = vld [vmem:[#allocation3] sm:$0xff]
  %v750 = vld [vmem:[%s4] sm:$0xff]
  %v751 = vld [vmem:[%s4 + $0x8] sm:$0xff]
  %v752 = vld [vmem:[%s4 + $0x10] sm:$0xff]
  %v753 = vld [vmem:[%s4 + $0x18] sm:$0xff]
  %v754 = vld [vmem:[%s5] sm:$0x1]
  %v756 = vperm.slane %v754, 0
  %v759 = vsel %vm115, %v749, 0
  %761 = vmatpush.msra.mxu0 0.0
  %762 = vmatpush.msra.mxu0 0.0
  %763 = vmatpush.msra.mxu0 0.0
  %764 = vmatpush.msra.mxu0 0.0
  %765 = vmatpush.msra.mxu0 0.0
  %766 = vmatpush.msra.mxu0 0.0
  %767 = vmatpush.msra.mxu0 0.0
  %768 = vmatpush.msra.mxu0 0.0
  %769 = vmatpush.msra.mxu0 0.0
  %770 = vmatpush.msra.mxu0 0.0
  %771 = vmatpush.msra.mxu0 0.0
  %772 = vmatpush.msra.mxu0 0.0
  %773 = vmatpush.msra.mxu0 %v753
  %774 = vmatpush.msra.mxu0 %v752
  %775 = vmatpush.msra.mxu0 %v751
  %776 = vmatpush.msra.mxu0 %v750
  %777 = vmatmul.f32.gmra.mxu0 %v759
  %v778 = vpop.f32.mrf.mxu0
  %v779 = vadd.f32 %v756, %v778
  %780 = vdwg.mxu0
  %781 = vst [vmem:[%s6] sm:$0xff] %v779
  // Predicated region
  $region26: #{lstm_model_forward.1} parent=0 // pred_check
    _
  $region27: #{lstm_model_forward.1} parent=0 // pred_check_branch
    %783 = sbr.rel (0) target = $region29
  $region28: #{lstm_model_forward.1} parent=0 // pred_region
    _
  $region29: #{lstm_model_forward.1} parent=0 // pred_fallthru
    _
  // Predicated region
  $region30: #{lstm_model_forward.1} parent=0 // pred_check
    _
  $region31: #{lstm_model_forward.1} parent=0 // pred_check_branch
    %785 = sbr.rel (0) target = $region33
  $region32: #{lstm_model_forward.1} parent=0 // pred_region
    _
  $region33: #{lstm_model_forward.1} parent=0 // pred_fallthru
    _

</llo_original>
